<compile_context>
chip_gen: v7x
topology: tpu7x:2x2x1
jax: 0.10.0
libtpu: 0.0.40
codegen_flags: <defaults>
</compile_context>

<pallas_src>
import math
import functools

import jax
import jax.numpy as jnp
from jax.experimental import pallas as pl
from jax.experimental.pallas import tpu as pltpu


def _round_up(x, m):
    return (x + m - 1) // m * m


# ----------------------------------------------------------------------------
# Pallas kernel: fc1 + fc2 + fully-fused dueling head (aggregation pre-folded).
# Shapes seen by the kernel (per grid step):
#   s_ref : (TB, H_pad)        w1_ref: (H_pad, H_pad)   b1_ref: (1, H_pad)
#   w2_ref: (H_pad, H2_pad)    b2_ref: (1, H2_pad)      (lane H2_pad-1 == 1.0)
#   wq_ref: (H2_pad, NQ_pad)   q_ref : (TB, NQ_pad)
# wq already encodes  Wa - mean(Wa) + Wv  with the folded bias in its last row
# (picked up by the constant-1 lane of h2), so the store is the dot output.
# ----------------------------------------------------------------------------
def dueling_kernel(s_ref, w1_ref, b1_ref, w2_ref, b2_ref, wq_ref, q_ref):
    # fc1 + relu (f32 MXU accumulation, f32 VPU epilogue)
    h1 = jnp.dot(s_ref[...], w1_ref[...], preferred_element_type=jnp.float32)
    h1 = jnp.maximum(h1 + b1_ref[...], 0.0)                       # (TB, H_pad)

    # fc2 + relu.  b2's last padded lane is 1.0 -> h2[:, -1] == 1.0, which
    # applies the folded head bias in the dot below.
    h2 = jnp.dot(h1.astype(w2_ref.dtype), w2_ref[...],
                 preferred_element_type=jnp.float32)
    h2 = jnp.maximum(h2 + b2_ref[...], 0.0)                       # (TB, H2_pad)

    # Fused dueling head: Q = h2 @ Wq (+ folded bias via constant-1 lane).
    # Lane-dense (TB, NQ_pad) store; lanes >= action_dim are zeros and are
    # sliced off outside the pallas_call.
    q_ref[...] = jnp.dot(h2.astype(wq_ref.dtype), wq_ref[...],
                         preferred_element_type=jnp.float32)


# ----------------------------------------------------------------------------
# One-time host-side padding + head fusion (call once, reuse across forwards).
# ----------------------------------------------------------------------------
def prepare_dueling_params(params, action_dim, *, weight_dtype=None):
    (w1, b1, w2, b2, wv, bv, wa, ba) = params
    H = w1.shape[0]
    H2 = w2.shape[1]                           # 64
    assert w1.shape == (H, H) and wa.shape == (H2, action_dim)

    f32 = jnp.float32
    wdt = f32 if weight_dtype is None else weight_dtype

    H_pad = _round_up(H, 128)
    H2_pad = _round_up(H2 + 1, 128)            # +1 reserves the constant-1 bias lane
    NQ_pad = _round_up(action_dim, 128)

    w1p = jnp.zeros((H_pad, H_pad), f32).at[:H, :H].set(w1)
    b1p = jnp.zeros((1, H_pad), f32).at[:, :H].set(b1)

    w2p = jnp.zeros((H_pad, H2_pad), f32).at[:H, :H2].set(w2)
    b2p = jnp.zeros((1, H2_pad), f32).at[:, :H2].set(b2)
    b2p = b2p.at[:, H2_pad - 1].set(1.0)       # constant-1 lane -> folds head bias

    # Fold the (linear) dueling aggregation into the head:
    #   Q = V + A - mean(A)  ==  h2 @ (Wa - mean_cols(Wa) + Wv) + (ba - mean(ba) + bv)
    wq = (wa - jnp.mean(wa, axis=1, keepdims=True)) + wv           # (H2, action_dim)
    bq = (ba - jnp.mean(ba, axis=1, keepdims=True)) + bv           # (1, action_dim)
    wqp = jnp.zeros((H2_pad, NQ_pad), f32)
    wqp = wqp.at[:H2, :action_dim].set(wq)
    wqp = wqp.at[H2_pad - 1, :action_dim].set(bq[0])               # folded bias row

    return dict(
        w1p=w1p.astype(wdt), b1p=b1p, w2p=w2p.astype(wdt), b2p=b2p,
        wqp=wqp.astype(wdt),
        H=H, H_pad=H_pad, H2_pad=H2_pad, NQ_pad=NQ_pad,
        action_dim=action_dim, wdt=wdt,
    )


def _make_call(TB, B_pad, H_pad, H2_pad, NQ_pad, vmem_limit, single_buffer_weights):
    """Build the pallas_call callable; weight specs optionally single-buffered."""
    def wspec(shape):
        if single_buffer_weights:
            return pl.BlockSpec(shape, lambda i: (0, 0),
                                pipeline_mode=pl.Buffered(1))
        return pl.BlockSpec(shape, lambda i: (0, 0))

    return pl.pallas_call(
        dueling_kernel,
        out_shape=jax.ShapeDtypeStruct((B_pad, NQ_pad), jnp.float32),
        grid_spec=pltpu.PrefetchScalarGridSpec(
            num_scalar_prefetch=0,
            grid=(B_pad // TB,),
            in_specs=[
                pl.BlockSpec((TB, H_pad), lambda i: (i, 0)),   # s (pipelined)
                wspec((H_pad, H_pad)),                         # w1 (resident)
                wspec((1, H_pad)),                             # b1
                wspec((H_pad, H2_pad)),                        # w2
                wspec((1, H2_pad)),                            # b2 (+1 lane)
                wspec((H2_pad, NQ_pad)),                       # fused dueling head
            ],
            out_specs=pl.BlockSpec((TB, NQ_pad), lambda i: (i, 0)),
        ),
        compiler_params=pltpu.CompilerParams(
            dimension_semantics=("parallel",),
            vmem_limit_bytes=vmem_limit,
        ),
    )


# ----------------------------------------------------------------------------
# Forward: (optional) activation padding + batch-gridded pallas_call.
# `prepared` comes from prepare_dueling_params (cache it across calls).
# ----------------------------------------------------------------------------
def dueling_net_forward(s, prepared):
    H, H_pad = prepared["H"], prepared["H_pad"]
    H2_pad, NQ_pad = prepared["H2_pad"], prepared["NQ_pad"]
    action_dim, wdt = prepared["action_dim"], prepared["wdt"]
    w1p, b1p, w2p, b2p, wqp = (prepared[k] for k in ("w1p", "b1p", "w2p", "b2p", "wqp"))

    B = s.shape[0]
    B8 = _round_up(B, 8)
    if B8 <= 16:
        TB = B8                                        # tiny batch: single step
    elif B8 <= 512:
        TB = min(256, _round_up((B8 + 1) // 2, 8))     # >= 2 steps -> both v7x TCs
    else:
        TB = 256                                       # MXU-friendly tile
    B_pad = _round_up(B8, TB)

    # Zero-copy activation path when already aligned; otherwise pad once.
    if B == B_pad and H == H_pad and s.dtype == wdt:
        sp = s
    else:
        sp = jnp.zeros((B_pad, H_pad), wdt).at[:B, :H].set(s.astype(wdt))

    # VMEM budget: 1x resident weights (single-buffered) + double-buffered
    # s/q tiles + headroom; capped per TPU generation (v7x = 64 MiB physical).
    weight_bytes = sum(int(x.size) * x.dtype.itemsize
                       for x in (w1p, b1p, w2p, b2p, wqp))
    tile_bytes = TB * H_pad * sp.dtype.itemsize + TB * NQ_pad * 4
    try:
        vmem_cap = int(getattr(pltpu.get_tpu_info(), "vmem_capacity_bytes",
                               128 << 20))
    except Exception:
        vmem_cap = 128 << 20
    vmem_ceiling = min(100 << 20, (vmem_cap * 3) // 4)   # ~48 MiB v7x, ~96 MiB v5e/v6e
    vmem_limit = int(min(vmem_ceiling,
                         max(32 << 20, weight_bytes + 2 * tile_bytes + (4 << 20))))

    args = (sp, w1p, b1p, w2p, b2p, wqp)
    try:
        q_pad = _make_call(TB, B_pad, H_pad, H2_pad, NQ_pad, vmem_limit,
                           single_buffer_weights=True)(*args)
    except Exception:
        # Fallback: default (double) buffering if Buffered(1) is rejected.
        q_pad = _make_call(TB, B_pad, H_pad, H2_pad, NQ_pad, vmem_limit,
                           single_buffer_weights=False)(*args)

    return q_pad[:B, :action_dim]


# ----------------------------------------------------------------------------
# Parameter construction (deterministic, PyTorch-default-like uniform ranges).
# ----------------------------------------------------------------------------
def _linear_params(key, in_f, out_f):
    kw, kb = jax.random.split(key)
    bound = 1.0 / math.sqrt(in_f)
    w = jax.random.uniform(kw, (in_f, out_f), jnp.float32, -bound, bound)
    b = jax.random.uniform(kb, (1, out_f), jnp.float32, -bound, bound)
    return w, b


def _scale_noise(key, size):
    x = jax.random.normal(key, (size,), jnp.float32)
    return jnp.sign(x) * jnp.sqrt(jnp.abs(x))


def _noisy_linear_params(key, in_f, out_f, sigma_init=0.5, training=True):
    """NoisyLinear effective (weight, bias) — factorized Gaussian noise."""
    kmu_w, kmu_b, keps_i, keps_j = jax.random.split(key, 4)
    mu_range = 1.0 / math.sqrt(in_f)
    w_mu = jax.random.uniform(kmu_w, (in_f, out_f), jnp.float32, -mu_range, mu_range)
    b_mu = jax.random.uniform(kmu_b, (1, out_f), jnp.float32, -mu_range, mu_range)
    w_sigma = jnp.full((in_f, out_f), sigma_init / math.sqrt(in_f), jnp.float32)
    b_sigma = jnp.full((1, out_f), sigma_init / math.sqrt(out_f), jnp.float32)
    if not training:
        return w_mu, b_mu
    eps_i = _scale_noise(keps_i, in_f)
    eps_j = _scale_noise(keps_j, out_f)
    w_eps = jnp.outer(eps_i, eps_j)          # == torch.ger(eps_j, eps_i).T
    b_eps = eps_j[None, :]
    return w_mu + w_sigma * w_eps, b_mu + b_sigma * b_eps


def make_dueling_params(key, hidden_dim, action_dim, use_noisy=True):
    k1, k2, kv, ka = jax.random.split(key, 4)
    w1, b1 = _linear_params(k1, hidden_dim, hidden_dim)
    w2, b2 = _linear_params(k2, hidden_dim, 64)
    if use_noisy:
        wv, bv = _noisy_linear_params(kv, 64, 1)
        wa, ba = _noisy_linear_params(ka, 64, action_dim)
    else:
        wv, bv = _linear_params(kv, 64, 1)
        wa, ba = _linear_params(ka, 64, action_dim)
    return (w1, b1, w2, b2, wv, bv, wa, ba)


# Pure-JAX reference (same math as the PyTorch module, no fusion/padding).
def _ref_forward(s, params):
    (w1, b1, w2, b2, wv, bv, wa, ba) = params
    h1 = jnp.maximum(s @ w1 + b1, 0.0)
    h2 = jnp.maximum(h1 @ w2 + b2, 0.0)
    v = h2 @ wv + bv
    a = h2 @ wa + ba
    return v + (a - jnp.mean(a, axis=-1, keepdims=True))


if __name__ == "__main__":
    batch = 2
    hidden_dim = 32
    action_dim = 6

    key = jax.random.PRNGKey(0)
    ks, kp = jax.random.split(key)

    s = jax.random.normal(ks, (batch, hidden_dim), jnp.float32)
    params = make_dueling_params(kp, hidden_dim, action_dim, use_noisy=True)

    # Prepare (pad + fuse) once; reuse across forwards.
    prepared = prepare_dueling_params(params, action_dim)   # f32 weights (exact path)

    q = dueling_net_forward(s, prepared)
    q = jax.block_until_ready(q)

    q_ref = _ref_forward(s, params)
    assert q.shape == (batch, action_dim)
    assert jnp.allclose(q, q_ref, atol=1e-4, rtol=1e-4), "mismatch vs reference"

    print("KERNEL_OK")
</pallas_src>

<mosaic_0001>
module attributes {stable_mosaic.version = 11 : i64} {
  func.func @dueling_kernel(%arg0: i32, %arg1: memref<8x128xf32, #tpu.memory_space<vmem>>, %arg2: memref<128x128xf32, #tpu.memory_space<vmem>>, %arg3: memref<1x128xf32, #tpu.memory_space<vmem>>, %arg4: memref<128x128xf32, #tpu.memory_space<vmem>>, %arg5: memref<1x128xf32, #tpu.memory_space<vmem>>, %arg6: memref<128x128xf32, #tpu.memory_space<vmem>>, %arg7: memref<8x128xf32, #tpu.memory_space<vmem>>) attributes {dimension_semantics = [#tpu.dimension_semantics<parallel>], iteration_bounds = array<i64: 1>, scalar_prefetch = 0 : i64, scratch_operands = 0 : i64, tpu.core_type = #tpu.core_type<tc>, window_params = [{transform_indices = @transform_0, window_bounds = array<i64: 8, 128>}, {pipeline_mode = #tpu.pipeline_mode<synchronous>, transform_indices = @transform_1, window_bounds = array<i64: 128, 128>}, {pipeline_mode = #tpu.pipeline_mode<synchronous>, transform_indices = @transform_2, window_bounds = array<i64: 1, 128>}, {pipeline_mode = #tpu.pipeline_mode<synchronous>, transform_indices = @transform_3, window_bounds = array<i64: 128, 128>}, {pipeline_mode = #tpu.pipeline_mode<synchronous>, transform_indices = @transform_4, window_bounds = array<i64: 1, 128>}, {pipeline_mode = #tpu.pipeline_mode<synchronous>, transform_indices = @transform_5, window_bounds = array<i64: 128, 128>}, {transform_indices = @transform_6, window_bounds = array<i64: 8, 128>}]} {
    %c0 = arith.constant 0 : index
    %c0_0 = arith.constant 0 : index
    %0 = vector.load %arg1[%c0, %c0_0] : memref<8x128xf32, #tpu.memory_space<vmem>>, vector<8x128xf32>
    %c0_1 = arith.constant 0 : index
    %c0_2 = arith.constant 0 : index
    %1 = vector.load %arg2[%c0_1, %c0_2] : memref<128x128xf32, #tpu.memory_space<vmem>>, vector<128x128xf32>
    %cst = arith.constant dense<0.000000e+00> : vector<8x128xf32>
    %2 = tpu.matmul %0, %1, %cst {dimension_numbers = #tpu.dot_dimension_numbers<[1], [0], [0], [1], [0, 0, 1, 1], [], []>} : vector<8x128xf32>, vector<128x128xf32>, vector<8x128xf32> -> vector<8x128xf32>
    %c0_3 = arith.constant 0 : index
    %c0_4 = arith.constant 0 : index
    %3 = vector.load %arg3[%c0_3, %c0_4] : memref<1x128xf32, #tpu.memory_space<vmem>>, vector<1x128xf32>
    %4 = vector.broadcast %3 : vector<1x128xf32> to vector<8x128xf32>
    %5 = arith.addf %2, %4 : vector<8x128xf32>
    %cst_5 = arith.constant 0.000000e+00 : f32
    %6 = vector.broadcast %cst_5 : f32 to vector<8x128xf32>
    %7 = arith.maximumf %5, %6 : vector<8x128xf32>
    %c0_6 = arith.constant 0 : index
    %c0_7 = arith.constant 0 : index
    %8 = vector.load %arg4[%c0_6, %c0_7] : memref<128x128xf32, #tpu.memory_space<vmem>>, vector<128x128xf32>
    %cst_8 = arith.constant dense<0.000000e+00> : vector<8x128xf32>
    %9 = tpu.matmul %7, %8, %cst_8 {dimension_numbers = #tpu.dot_dimension_numbers<[1], [0], [0], [1], [0, 0, 1, 1], [], []>} : vector<8x128xf32>, vector<128x128xf32>, vector<8x128xf32> -> vector<8x128xf32>
    %c0_9 = arith.constant 0 : index
    %c0_10 = arith.constant 0 : index
    %10 = vector.load %arg5[%c0_9, %c0_10] : memref<1x128xf32, #tpu.memory_space<vmem>>, vector<1x128xf32>
    %11 = vector.broadcast %10 : vector<1x128xf32> to vector<8x128xf32>
    %12 = arith.addf %9, %11 : vector<8x128xf32>
    %cst_11 = arith.constant 0.000000e+00 : f32
    %13 = vector.broadcast %cst_11 : f32 to vector<8x128xf32>
    %14 = arith.maximumf %12, %13 : vector<8x128xf32>
    %c0_12 = arith.constant 0 : index
    %c0_13 = arith.constant 0 : index
    %15 = vector.load %arg6[%c0_12, %c0_13] : memref<128x128xf32, #tpu.memory_space<vmem>>, vector<128x128xf32>
    %cst_14 = arith.constant dense<0.000000e+00> : vector<8x128xf32>
    %16 = tpu.matmul %14, %15, %cst_14 {dimension_numbers = #tpu.dot_dimension_numbers<[1], [0], [0], [1], [0, 0, 1, 1], [], []>} : vector<8x128xf32>, vector<128x128xf32>, vector<8x128xf32> -> vector<8x128xf32>
    %c0_15 = arith.constant 0 : index
    %c0_16 = arith.constant 0 : index
    %17 = vector.load %arg7[%c0_15, %c0_16] : memref<8x128xf32, #tpu.memory_space<vmem>>, vector<8x128xf32>
    tpu.vector_store %arg7[%c0_15, %c0_16], %16 {strides = array<i32>} : memref<8x128xf32, #tpu.memory_space<vmem>>, vector<8x128xf32>,
    return
  }
  func.func @transform_0(%arg0: i32) -> (i32, i32) {
    %c0_i32 = arith.constant 0 : i32
    %c0_i32_0 = arith.constant 0 : i32
    return %arg0, %c0_i32 : i32, i32
  }
  func.func @transform_1(%arg0: i32) -> (i32, i32) {
    %c0_i32 = arith.constant 0 : i32
    %c0_i32_0 = arith.constant 0 : i32
    %c0_i32_1 = arith.constant 0 : i32
    return %c0_i32, %c0_i32_0 : i32, i32
  }
  func.func @transform_2(%arg0: i32) -> (i32, i32) {
    %c0_i32 = arith.constant 0 : i32
    %c0_i32_0 = arith.constant 0 : i32
    %c0_i32_1 = arith.constant 0 : i32
    return %c0_i32, %c0_i32_0 : i32, i32
  }
  func.func @transform_3(%arg0: i32) -> (i32, i32) {
    %c0_i32 = arith.constant 0 : i32
    %c0_i32_0 = arith.constant 0 : i32
    %c0_i32_1 = arith.constant 0 : i32
    return %c0_i32, %c0_i32_0 : i32, i32
  }
  func.func @transform_4(%arg0: i32) -> (i32, i32) {
    %c0_i32 = arith.constant 0 : i32
    %c0_i32_0 = arith.constant 0 : i32
    %c0_i32_1 = arith.constant 0 : i32
    return %c0_i32, %c0_i32_0 : i32, i32
  }
  func.func @transform_5(%arg0: i32) -> (i32, i32) {
    %c0_i32 = arith.constant 0 : i32
    %c0_i32_0 = arith.constant 0 : i32
    %c0_i32_1 = arith.constant 0 : i32
    return %c0_i32, %c0_i32_0 : i32, i32
  }
  func.func @transform_6(%arg0: i32) -> (i32, i32) {
    %c0_i32 = arith.constant 0 : i32
    %c0_i32_0 = arith.constant 0 : i32
    return %arg0, %c0_i32 : i32, i32
  }
}

module attributes {stable_mosaic.version = 11 : i64} {
  func.func @dueling_kernel(%arg0: i32, %arg1: memref<8x128xf32, #tpu.memory_space<vmem>>, %arg2: memref<128x128xf32, #tpu.memory_space<vmem>>, %arg3: memref<1x128xf32, #tpu.memory_space<vmem>>, %arg4: memref<128x128xf32, #tpu.memory_space<vmem>>, %arg5: memref<1x128xf32, #tpu.memory_space<vmem>>, %arg6: memref<128x128xf32, #tpu.memory_space<vmem>>, %arg7: memref<8x128xf32, #tpu.memory_space<vmem>>) attributes {dimension_semantics = [#tpu.dimension_semantics<parallel>], iteration_bounds = array<i64: 1>, scalar_prefetch = 0 : i64, scratch_operands = 0 : i64, tpu.core_type = #tpu.core_type<tc>, window_params = [{transform_indices = @transform_0, window_bounds = array<i64: 8, 128>}, {pipeline_mode = #tpu.pipeline_mode<synchronous>, transform_indices = @transform_1, window_bounds = array<i64: 128, 128>}, {pipeline_mode = #tpu.pipeline_mode<synchronous>, transform_indices = @transform_2, window_bounds = array<i64: 1, 128>}, {pipeline_mode = #tpu.pipeline_mode<synchronous>, transform_indices = @transform_3, window_bounds = array<i64: 128, 128>}, {pipeline_mode = #tpu.pipeline_mode<synchronous>, transform_indices = @transform_4, window_bounds = array<i64: 1, 128>}, {pipeline_mode = #tpu.pipeline_mode<synchronous>, transform_indices = @transform_5, window_bounds = array<i64: 128, 128>}, {transform_indices = @transform_6, window_bounds = array<i64: 8, 128>}]} {
    %c0 = arith.constant 0 : index
    %c0_0 = arith.constant 0 : index
    %0 = vector.load %arg1[%c0, %c0_0] : memref<8x128xf32, #tpu.memory_space<vmem>>, vector<8x128xf32>
    %c0_1 = arith.constant 0 : index
    %c0_2 = arith.constant 0 : index
    %1 = vector.load %arg2[%c0_1, %c0_2] : memref<128x128xf32, #tpu.memory_space<vmem>>, vector<128x128xf32>
    %cst = arith.constant dense<0.000000e+00> : vector<8x128xf32>
    %2 = tpu.matmul %0, %1, %cst {dimension_numbers = #tpu.dot_dimension_numbers<[1], [0], [0], [1], [0, 0, 1, 1], [], []>} : vector<8x128xf32>, vector<128x128xf32>, vector<8x128xf32> -> vector<8x128xf32>
    %c0_3 = arith.constant 0 : index
    %c0_4 = arith.constant 0 : index
    %3 = vector.load %arg3[%c0_3, %c0_4] : memref<1x128xf32, #tpu.memory_space<vmem>>, vector<1x128xf32>
    %4 = vector.broadcast %3 : vector<1x128xf32> to vector<8x128xf32>
    %5 = arith.addf %2, %4 : vector<8x128xf32>
    %cst_5 = arith.constant 0.000000e+00 : f32
    %6 = vector.broadcast %cst_5 : f32 to vector<8x128xf32>
    %7 = arith.maximumf %5, %6 : vector<8x128xf32>
    %c0_6 = arith.constant 0 : index
    %c0_7 = arith.constant 0 : index
    %8 = vector.load %arg4[%c0_6, %c0_7] : memref<128x128xf32, #tpu.memory_space<vmem>>, vector<128x128xf32>
    %cst_8 = arith.constant dense<0.000000e+00> : vector<8x128xf32>
    %9 = tpu.matmul %7, %8, %cst_8 {dimension_numbers = #tpu.dot_dimension_numbers<[1], [0], [0], [1], [0, 0, 1, 1], [], []>} : vector<8x128xf32>, vector<128x128xf32>, vector<8x128xf32> -> vector<8x128xf32>
    %c0_9 = arith.constant 0 : index
    %c0_10 = arith.constant 0 : index
    %10 = vector.load %arg5[%c0_9, %c0_10] : memref<1x128xf32, #tpu.memory_space<vmem>>, vector<1x128xf32>
    %11 = vector.broadcast %10 : vector<1x128xf32> to vector<8x128xf32>
    %12 = arith.addf %9, %11 : vector<8x128xf32>
    %cst_11 = arith.constant 0.000000e+00 : f32
    %13 = vector.broadcast %cst_11 : f32 to vector<8x128xf32>
    %14 = arith.maximumf %12, %13 : vector<8x128xf32>
    %c0_12 = arith.constant 0 : index
    %c0_13 = arith.constant 0 : index
    %15 = vector.load %arg6[%c0_12, %c0_13] : memref<128x128xf32, #tpu.memory_space<vmem>>, vector<128x128xf32>
    %cst_14 = arith.constant dense<0.000000e+00> : vector<8x128xf32>
    %16 = tpu.matmul %14, %15, %cst_14 {dimension_numbers = #tpu.dot_dimension_numbers<[1], [0], [0], [1], [0, 0, 1, 1], [], []>} : vector<8x128xf32>, vector<128x128xf32>, vector<8x128xf32> -> vector<8x128xf32>
    %c0_15 = arith.constant 0 : index
    %c0_16 = arith.constant 0 : index
    %17 = vector.load %arg7[%c0_15, %c0_16] : memref<8x128xf32, #tpu.memory_space<vmem>>, vector<8x128xf32>
    tpu.vector_store %arg7[%c0_15, %c0_16], %16 {strides = array<i32>} : memref<8x128xf32, #tpu.memory_space<vmem>>, vector<8x128xf32>,
    return
  }
  func.func @transform_0(%arg0: i32) -> (i32, i32) {
    %c0_i32 = arith.constant 0 : i32
    %c0_i32_0 = arith.constant 0 : i32
    return %arg0, %c0_i32 : i32, i32
  }
  func.func @transform_1(%arg0: i32) -> (i32, i32) {
    %c0_i32 = arith.constant 0 : i32
    %c0_i32_0 = arith.constant 0 : i32
    %c0_i32_1 = arith.constant 0 : i32
    return %c0_i32, %c0_i32_0 : i32, i32
  }
  func.func @transform_2(%arg0: i32) -> (i32, i32) {
    %c0_i32 = arith.constant 0 : i32
    %c0_i32_0 = arith.constant 0 : i32
    %c0_i32_1 = arith.constant 0 : i32
    return %c0_i32, %c0_i32_0 : i32, i32
  }
  func.func @transform_3(%arg0: i32) -> (i32, i32) {
    %c0_i32 = arith.constant 0 : i32
    %c0_i32_0 = arith.constant 0 : i32
    %c0_i32_1 = arith.constant 0 : i32
    return %c0_i32, %c0_i32_0 : i32, i32
  }
  func.func @transform_4(%arg0: i32) -> (i32, i32) {
    %c0_i32 = arith.constant 0 : i32
    %c0_i32_0 = arith.constant 0 : i32
    %c0_i32_1 = arith.constant 0 : i32
    return %c0_i32, %c0_i32_0 : i32, i32
  }
  func.func @transform_5(%arg0: i32) -> (i32, i32) {
    %c0_i32 = arith.constant 0 : i32
    %c0_i32_0 = arith.constant 0 : i32
    %c0_i32_1 = arith.constant 0 : i32
    return %c0_i32, %c0_i32_0 : i32, i32
  }
  func.func @transform_6(%arg0: i32) -> (i32, i32) {
    %c0_i32 = arith.constant 0 : i32
    %c0_i32_0 = arith.constant 0 : i32
    return %arg0, %c0_i32 : i32, i32
  }
}

</mosaic_0001>

<llo_original>
// kernel: tpu_custom_call.1
$region0: #{tpu_custom_call.1}
  #allocation0 [shape = 'u32[]', space=smem, size = 0x4, offset = 0x4, fixed_abs, tag = 'smem constant byte address 0x4 - core index']
  #allocation1 [shape = 'u32[144,128]{1,0:T(1,128)}', space=vmem, size = 0x12000, scoped, tag = 'internal scratch']
  %s0 = inlined_call_operand.hbm [shape: f32[8,128], index: 0, kind: input, shape index: {}]
  %s1 = inlined_call_operand.hbm [shape: f32[128,128], index: 1, kind: input, shape index: {}]
  %s2 = inlined_call_operand.vmem [shape: f32[1,128], index: 2, kind: input, shape index: {}]
  %s3 = inlined_call_operand.hbm [shape: f32[128,128], index: 3, kind: input, shape index: {}]
  %s4 = inlined_call_operand.vmem [shape: f32[1,128], index: 4, kind: input, shape index: {}]
  %s5 = inlined_call_operand.hbm [shape: f32[128,128], index: 5, kind: input, shape index: {}]
  %s6 = inlined_call_operand.hbm [shape: f32[8,128], index: 6, kind: output, shape index: {}]
  %s7 = sld [smem:[#allocation0]]
  $region50: #{tpu_custom_call.1} parent=0
    _
  %s9 = ssub.s32 1, %s7
  %s10 = scalar_select 0, %s9, %s7
  $region1: #{tpu_custom_call.1} parent=0
    #allocation2 [shape = 'u8[4096]{0}', space=vmem, size = 0x1000, scoped, tag = 'input window, operand 0, single buffered']
    #allocation3 [shape = 's32[1]{0}', space=sflag, size = 0x4, scoped, tag = 'scoped memory for tpu_custom_call.1']
    #allocation4 [shape = 's32[1]{0}', space=sflag, size = 0x4, scoped, tag = 'scoped memory for tpu_custom_call.1']
    #allocation5 [shape = 'u8[65536]{0}', space=vmem, size = 0x10000, scoped, tag = 'input window, operand 1, single buffered']
    #allocation6 [shape = 's32[1]{0}', space=sflag, size = 0x4, scoped, tag = 'scoped memory for tpu_custom_call.1']
    #allocation7 [shape = 'u8[65536]{0}', space=vmem, size = 0x10000, scoped, tag = 'input window, operand 3, single buffered']
    #allocation8 [shape = 'u8[65536]{0}', space=vmem, size = 0x10000, scoped, tag = 'input window, operand 5, single buffered']
    #allocation9 [shape = 's32[1]{0}', space=sflag, size = 0x4, scoped, tag = 'scoped memory for tpu_custom_call.1']
    #allocation10 [shape = 'u8[4096]{0}', space=vmem, size = 0x1000, scoped, tag = 'output window, operand 0, single buffered']
    %11 = vsyncpa [#allocation3], 0
    %12 = vsyncpa [#allocation6], 0
    %13 = vsyncpa [#allocation9], 0
    %14 = vsyncpa [#allocation4], 0
    // Predicated region
    $region2: #{tpu_custom_call.1} parent=1 // pred_check
      _
    $region3: #{tpu_custom_call.1} parent=1 // pred_check_branch
      %16 = sbr.rel (0) target = $region5
    $region4: #{tpu_custom_call.1} parent=1 // pred_region
      %s18 = ssub.s32 128, 128
      %19 = vsyncadd [#allocation3], %s18
      %s21 = sshll.u32 [#allocation2], 4
      %s22 = int_to_ptr.vmem [resolvable:$true] %s21
      %24 = dma.hbm_to_vmem [thread:$0]  %s0, 128, %s22, [#allocation3]
    $region5: #{tpu_custom_call.1} parent=1 // pred_fallthru
      _
    // Predicated region
    $region6: #{tpu_custom_call.1} parent=1 // pred_check
      _
    $region7: #{tpu_custom_call.1} parent=1 // pred_check_branch
      %26 = sbr.rel (0) target = $region9
    $region8: #{tpu_custom_call.1} parent=1 // pred_region
      %s28 = ssub.s32 2048, 2048
      %29 = vsyncadd [#allocation6], %s28
      %s30 = sshll.u32 [#allocation5], 4
      %s31 = int_to_ptr.vmem [resolvable:$true] %s30
      %36 = dma.hbm_to_vmem [thread:$0]  %s1, 2048, %s31, [#allocation6], 128, 128, 8
    $region9: #{tpu_custom_call.1} parent=1 // pred_fallthru
      _
    // Predicated region
    $region10: #{tpu_custom_call.1} parent=1 // pred_check
      _
    $region11: #{tpu_custom_call.1} parent=1 // pred_check_branch
      %38 = sbr.rel (0) target = $region13
    $region12: #{tpu_custom_call.1} parent=1 // pred_region
      _
    $region13: #{tpu_custom_call.1} parent=1 // pred_fallthru
      _
    // Predicated region
    $region14: #{tpu_custom_call.1} parent=1 // pred_check
      _
    $region15: #{tpu_custom_call.1} parent=1 // pred_check_branch
      %40 = sbr.rel (0) target = $region17
    $region16: #{tpu_custom_call.1} parent=1 // pred_region
      %s42 = ssub.s32 2048, 2048
      %43 = vsyncadd [#allocation6], %s42
      %s44 = sshll.u32 [#allocation7], 4
      %s45 = int_to_ptr.vmem [resolvable:$true] %s44
      %50 = dma.hbm_to_vmem [thread:$0]  %s3, 2048, %s45, [#allocation6], 128, 128, 8
    $region17: #{tpu_custom_call.1} parent=1 // pred_fallthru
      _
    // Predicated region
    $region18: #{tpu_custom_call.1} parent=1 // pred_check
      _
    $region19: #{tpu_custom_call.1} parent=1 // pred_check_branch
      %52 = sbr.rel (0) target = $region21
    $region20: #{tpu_custom_call.1} parent=1 // pred_region
      _
    $region21: #{tpu_custom_call.1} parent=1 // pred_fallthru
      _
    // Predicated region
    $region22: #{tpu_custom_call.1} parent=1 // pred_check
      _
    $region23: #{tpu_custom_call.1} parent=1 // pred_check_branch
      %54 = sbr.rel (0) target = $region25
    $region24: #{tpu_custom_call.1} parent=1 // pred_region
      %s56 = ssub.s32 2048, 2048
      %57 = vsyncadd [#allocation9], %s56
      %s58 = sshll.u32 [#allocation8], 4
      %s59 = int_to_ptr.vmem [resolvable:$true] %s58
      %64 = dma.hbm_to_vmem [thread:$0]  %s5, 2048, %s59, [#allocation9], 128, 128, 8
    $region25: #{tpu_custom_call.1} parent=1 // pred_fallthru
      _
    // Predicated region
    $region26: #{tpu_custom_call.1} parent=1 // pred_check
      _
    $region27: #{tpu_custom_call.1} parent=1 // pred_check_branch
      %66 = sbr.rel (0) target = $region29
    $region28: #{tpu_custom_call.1} parent=1 // pred_region
      %67 = dma.done [#allocation3], 128
    $region29: #{tpu_custom_call.1} parent=1 // pred_fallthru
      _
    // Predicated region
    $region30: #{tpu_custom_call.1} parent=1 // pred_check
      _
    $region31: #{tpu_custom_call.1} parent=1 // pred_check_branch
      %69 = sbr.rel (0) target = $region33
    $region32: #{tpu_custom_call.1} parent=1 // pred_region
      %70 = dma.done [#allocation6], 2048
    $region33: #{tpu_custom_call.1} parent=1 // pred_fallthru
      _
    // Predicated region
    $region34: #{tpu_custom_call.1} parent=1 // pred_check
      _
    $region35: #{tpu_custom_call.1} parent=1 // pred_check_branch
      %72 = sbr.rel (0) target = $region37
    $region36: #{tpu_custom_call.1} parent=1 // pred_region
      %73 = dma.done [#allocation6], 2048
    $region37: #{tpu_custom_call.1} parent=1 // pred_fallthru
      _
    // Predicated region
    $region38: #{tpu_custom_call.1} parent=1 // pred_check
      _
    $region39: #{tpu_custom_call.1} parent=1 // pred_check_branch
      %75 = sbr.rel (0) target = $region41
    $region40: #{tpu_custom_call.1} parent=1 // pred_region
      %76 = dma.done [#allocation9], 2048
    $region41: #{tpu_custom_call.1} parent=1 // pred_fallthru
      _
    %v77 = vld [vmem:[#allocation2] sm:$0xff]
    %v78 = vld [vmem:[#allocation5] sm:$0xff]
    %v79 = vld [vmem:[#allocation5 + $0x8] sm:$0xff]
    %v80 = vld [vmem:[#allocation5 + $0x10] sm:$0xff]
    %v81 = vld [vmem:[#allocation5 + $0x18] sm:$0xff]
    %v82 = vld [vmem:[#allocation5 + $0x20] sm:$0xff]
    %v83 = vld [vmem:[#allocation5 + $0x28] sm:$0xff]
    %v84 = vld [vmem:[#allocation5 + $0x30] sm:$0xff]
    %v85 = vld [vmem:[#allocation5 + $0x38] sm:$0xff]
    %v86 = vld [vmem:[#allocation5 + $0x40] sm:$0xff]
    %v87 = vld [vmem:[#allocation5 + $0x48] sm:$0xff]
    %v88 = vld [vmem:[#allocation5 + $0x50] sm:$0xff]
    %v89 = vld [vmem:[#allocation5 + $0x58] sm:$0xff]
    %v90 = vld [vmem:[#allocation5 + $0x60] sm:$0xff]
    %v91 = vld [vmem:[#allocation5 + $0x68] sm:$0xff]
    %v92 = vld [vmem:[#allocation5 + $0x70] sm:$0xff]
    %v93 = vld [vmem:[#allocation5 + $0x78] sm:$0xff]
    %v94 = vld [vmem:[%s2] sm:$0x1]
    %v96 = vlaneseq
    %v97 = vshrl.u32 %v96, 7
    %v98 = vsub.s32 0, %v97
    %v99 = vrot.slane %v94, %v98
    %101 = vmatprep.subr.mxu0 0.0
    %102 = vmatpush1.msra.mxu0 %v78
    %103 = vmatprep.subr.mxu0 0.0
    %104 = vmatpush1.msra.mxu0 %v79
    %105 = vmatprep.subr.mxu0 0.0
    %106 = vmatpush1.msra.mxu0 %v80
    %107 = vmatprep.subr.mxu0 0.0
    %108 = vmatpush1.msra.mxu0 %v81
    %109 = vmatprep.subr.mxu0 0.0
    %110 = vmatpush1.msra.mxu0 %v82
    %111 = vmatprep.subr.mxu0 0.0
    %112 = vmatpush1.msra.mxu0 %v83
    %113 = vmatprep.subr.mxu0 0.0
    %114 = vmatpush1.msra.mxu0 %v84
    %115 = vmatprep.subr.mxu0 0.0
    %116 = vmatpush1.msra.mxu0 %v85
    %117 = vmatprep.subr.mxu0 0.0
    %118 = vmatpush1.msra.mxu0 %v86
    %119 = vmatprep.subr.mxu0 0.0
    %120 = vmatpush1.msra.mxu0 %v87
    %121 = vmatprep.subr.mxu0 0.0
    %122 = vmatpush1.msra.mxu0 %v88
    %123 = vmatprep.subr.mxu0 0.0
    %124 = vmatpush1.msra.mxu0 %v89
    %125 = vmatprep.subr.mxu0 0.0
    %126 = vmatpush1.msra.mxu0 %v90
    %127 = vmatprep.subr.mxu0 0.0
    %128 = vmatpush1.msra.mxu0 %v91
    %129 = vmatprep.subr.mxu0 0.0
    %130 = vmatpush1.msra.mxu0 %v92
    %131 = vmatprep.subr.mxu0 0.0
    %132 = vmatpush1.msra.mxu0 %v93
    %133 = vmatprep.subr.mxu0 0.0
    %134 = vmatpush1.msra.mxu0 0.0
    %135 = vmatprep.subr.mxu0 0.0
    %136 = vmatpush1.msra.mxu0 0.0
    %137 = vmatprep.subr.mxu0 0.0
    %138 = vmatpush1.msra.mxu0 0.0
    %139 = vmatprep.subr.mxu0 0.0
    %140 = vmatpush1.msra.mxu0 0.0
    %141 = vmatprep.subr.mxu0 0.0
    %142 = vmatpush1.msra.mxu0 0.0
    %143 = vmatprep.subr.mxu0 0.0
    %144 = vmatpush1.msra.mxu0 0.0
    %145 = vmatprep.subr.mxu0 0.0
    %146 = vmatpush1.msra.mxu0 0.0
    %147 = vmatprep.subr.mxu0 0.0
    %148 = vmatpush1.msra.mxu0 0.0
    %149 = vmatprep.subr.mxu0 0.0
    %150 = vmatpush1.msra.mxu0 0.0
    %151 = vmatprep.subr.mxu0 0.0
    %152 = vmatpush1.msra.mxu0 0.0
    %153 = vmatprep.subr.mxu0 0.0
    %154 = vmatpush1.msra.mxu0 0.0
    %155 = vmatprep.subr.mxu0 0.0
    %156 = vmatpush1.msra.mxu0 0.0
    %157 = vmatprep.subr.mxu0 0.0
    %158 = vmatpush1.msra.mxu0 0.0
    %159 = vmatprep.subr.mxu0 0.0
    %160 = vmatpush1.msra.mxu0 0.0
    %161 = vmatprep.subr.mxu0 0.0
    %162 = vmatpush1.msra.mxu0 0.0
    %163 = vmatprep.subr.mxu0 0.0
    %164 = vmatpush1.msra.mxu0 0.0
    %165 = vmatprep.mubr.f32.mxu0 0.0
    %166 = vmatmul.mubr.f32.gmra.mrb[0].mxu0 %v77
    %v167 = vpop.f32.mrb[0].mxu0
    %v168 = vadd.f32 %v99, %v167
    %v169 = vpop.f32.mrb[0].mxu0
    %170 = vdwg.mxu0
    %v171 = vmax.f32 %v168, 0.0
    %v172 = vld [vmem:[#allocation7] sm:$0xff]
    %v173 = vld [vmem:[#allocation7 + $0x8] sm:$0xff]
    %v174 = vld [vmem:[#allocation7 + $0x10] sm:$0xff]
    %v175 = vld [vmem:[#allocation7 + $0x18] sm:$0xff]
    %v176 = vld [vmem:[#allocation7 + $0x20] sm:$0xff]
    %v177 = vld [vmem:[#allocation7 + $0x28] sm:$0xff]
    %v178 = vld [vmem:[#allocation7 + $0x30] sm:$0xff]
    %v179 = vld [vmem:[#allocation7 + $0x38] sm:$0xff]
    %v180 = vld [vmem:[#allocation7 + $0x40] sm:$0xff]
    %v181 = vld [vmem:[#allocation7 + $0x48] sm:$0xff]
    %v182 = vld [vmem:[#allocation7 + $0x50] sm:$0xff]
    %v183 = vld [vmem:[#allocation7 + $0x58] sm:$0xff]
    %v184 = vld [vmem:[#allocation7 + $0x60] sm:$0xff]
    %v185 = vld [vmem:[#allocation7 + $0x68] sm:$0xff]
    %v186 = vld [vmem:[#allocation7 + $0x70] sm:$0xff]
    %v187 = vld [vmem:[#allocation7 + $0x78] sm:$0xff]
    %v188 = vld [vmem:[%s4] sm:$0x1]
    %v190 = vlaneseq
    %v191 = vshrl.u32 %v190, 7
    %v192 = vsub.s32 0, %v191
    %v193 = vrot.slane %v188, %v192
    %195 = vmatprep.subr.mxu0 0.0
    %196 = vmatpush1.msra.mxu0 %v172
    %197 = vmatprep.subr.mxu0 0.0
    %198 = vmatpush1.msra.mxu0 %v173
    %199 = vmatprep.subr.mxu0 0.0
    %200 = vmatpush1.msra.mxu0 %v174
    %201 = vmatprep.subr.mxu0 0.0
    %202 = vmatpush1.msra.mxu0 %v175
    %203 = vmatprep.subr.mxu0 0.0
    %204 = vmatpush1.msra.mxu0 %v176
    %205 = vmatprep.subr.mxu0 0.0
    %206 = vmatpush1.msra.mxu0 %v177
    %207 = vmatprep.subr.mxu0 0.0
    %208 = vmatpush1.msra.mxu0 %v178
    %209 = vmatprep.subr.mxu0 0.0
    %210 = vmatpush1.msra.mxu0 %v179
    %211 = vmatprep.subr.mxu0 0.0
    %212 = vmatpush1.msra.mxu0 %v180
    %213 = vmatprep.subr.mxu0 0.0
    %214 = vmatpush1.msra.mxu0 %v181
    %215 = vmatprep.subr.mxu0 0.0
    %216 = vmatpush1.msra.mxu0 %v182
    %217 = vmatprep.subr.mxu0 0.0
    %218 = vmatpush1.msra.mxu0 %v183
    %219 = vmatprep.subr.mxu0 0.0
    %220 = vmatpush1.msra.mxu0 %v184
    %221 = vmatprep.subr.mxu0 0.0
    %222 = vmatpush1.msra.mxu0 %v185
    %223 = vmatprep.subr.mxu0 0.0
    %224 = vmatpush1.msra.mxu0 %v186
    %225 = vmatprep.subr.mxu0 0.0
    %226 = vmatpush1.msra.mxu0 %v187
    %227 = vmatprep.subr.mxu0 0.0
    %228 = vmatpush1.msra.mxu0 0.0
    %229 = vmatprep.subr.mxu0 0.0
    %230 = vmatpush1.msra.mxu0 0.0
    %231 = vmatprep.subr.mxu0 0.0
    %232 = vmatpush1.msra.mxu0 0.0
    %233 = vmatprep.subr.mxu0 0.0
    %234 = vmatpush1.msra.mxu0 0.0
    %235 = vmatprep.subr.mxu0 0.0
    %236 = vmatpush1.msra.mxu0 0.0
    %237 = vmatprep.subr.mxu0 0.0
    %238 = vmatpush1.msra.mxu0 0.0
    %239 = vmatprep.subr.mxu0 0.0
    %240 = vmatpush1.msra.mxu0 0.0
    %241 = vmatprep.subr.mxu0 0.0
    %242 = vmatpush1.msra.mxu0 0.0
    %243 = vmatprep.subr.mxu0 0.0
    %244 = vmatpush1.msra.mxu0 0.0
    %245 = vmatprep.subr.mxu0 0.0
    %246 = vmatpush1.msra.mxu0 0.0
    %247 = vmatprep.subr.mxu0 0.0
    %248 = vmatpush1.msra.mxu0 0.0
    %249 = vmatprep.subr.mxu0 0.0
    %250 = vmatpush1.msra.mxu0 0.0
    %251 = vmatprep.subr.mxu0 0.0
    %252 = vmatpush1.msra.mxu0 0.0
    %253 = vmatprep.subr.mxu0 0.0
    %254 = vmatpush1.msra.mxu0 0.0
    %255 = vmatprep.subr.mxu0 0.0
    %256 = vmatpush1.msra.mxu0 0.0
    %257 = vmatprep.subr.mxu0 0.0
    %258 = vmatpush1.msra.mxu0 0.0
    %259 = vmatprep.mubr.f32.mxu0 0.0
    %260 = vmatmul.mubr.f32.gmra.mrb[0].mxu0 %v171
    %v261 = vpop.f32.mrb[0].mxu0
    %v262 = vadd.f32 %v193, %v261
    %v263 = vpop.f32.mrb[0].mxu0
    %264 = vdwg.mxu0
    %v265 = vmax.f32 %v262, 0.0
    %v266 = vld [vmem:[#allocation8] sm:$0xff]
    %v267 = vld [vmem:[#allocation8 + $0x8] sm:$0xff]
    %v268 = vld [vmem:[#allocation8 + $0x10] sm:$0xff]
    %v269 = vld [vmem:[#allocation8 + $0x18] sm:$0xff]
    %v270 = vld [vmem:[#allocation8 + $0x20] sm:$0xff]
    %v271 = vld [vmem:[#allocation8 + $0x28] sm:$0xff]
    %v272 = vld [vmem:[#allocation8 + $0x30] sm:$0xff]
    %v273 = vld [vmem:[#allocation8 + $0x38] sm:$0xff]
    %v274 = vld [vmem:[#allocation8 + $0x40] sm:$0xff]
    %v275 = vld [vmem:[#allocation8 + $0x48] sm:$0xff]
    %v276 = vld [vmem:[#allocation8 + $0x50] sm:$0xff]
    %v277 = vld [vmem:[#allocation8 + $0x58] sm:$0xff]
    %v278 = vld [vmem:[#allocation8 + $0x60] sm:$0xff]
    %v279 = vld [vmem:[#allocation8 + $0x68] sm:$0xff]
    %v280 = vld [vmem:[#allocation8 + $0x70] sm:$0xff]
    %v281 = vld [vmem:[#allocation8 + $0x78] sm:$0xff]
    %282 = vmatprep.subr.mxu0 0.0
    %283 = vmatpush1.msra.mxu0 %v266
    %284 = vmatprep.subr.mxu0 0.0
    %285 = vmatpush1.msra.mxu0 %v267
    %286 = vmatprep.subr.mxu0 0.0
    %287 = vmatpush1.msra.mxu0 %v268
    %288 = vmatprep.subr.mxu0 0.0
    %289 = vmatpush1.msra.mxu0 %v269
    %290 = vmatprep.subr.mxu0 0.0
    %291 = vmatpush1.msra.mxu0 %v270
    %292 = vmatprep.subr.mxu0 0.0
    %293 = vmatpush1.msra.mxu0 %v271
    %294 = vmatprep.subr.mxu0 0.0
    %295 = vmatpush1.msra.mxu0 %v272
    %296 = vmatprep.subr.mxu0 0.0
    %297 = vmatpush1.msra.mxu0 %v273
    %298 = vmatprep.subr.mxu0 0.0
    %299 = vmatpush1.msra.mxu0 %v274
    %300 = vmatprep.subr.mxu0 0.0
    %301 = vmatpush1.msra.mxu0 %v275
    %302 = vmatprep.subr.mxu0 0.0
    %303 = vmatpush1.msra.mxu0 %v276
    %304 = vmatprep.subr.mxu0 0.0
    %305 = vmatpush1.msra.mxu0 %v277
    %306 = vmatprep.subr.mxu0 0.0
    %307 = vmatpush1.msra.mxu0 %v278
    %308 = vmatprep.subr.mxu0 0.0
    %309 = vmatpush1.msra.mxu0 %v279
    %310 = vmatprep.subr.mxu0 0.0
    %311 = vmatpush1.msra.mxu0 %v280
    %312 = vmatprep.subr.mxu0 0.0
    %313 = vmatpush1.msra.mxu0 %v281
    %314 = vmatprep.subr.mxu0 0.0
    %315 = vmatpush1.msra.mxu0 0.0
    %316 = vmatprep.subr.mxu0 0.0
    %317 = vmatpush1.msra.mxu0 0.0
    %318 = vmatprep.subr.mxu0 0.0
    %319 = vmatpush1.msra.mxu0 0.0
    %320 = vmatprep.subr.mxu0 0.0
    %321 = vmatpush1.msra.mxu0 0.0
    %322 = vmatprep.subr.mxu0 0.0
    %323 = vmatpush1.msra.mxu0 0.0
    %324 = vmatprep.subr.mxu0 0.0
    %325 = vmatpush1.msra.mxu0 0.0
    %326 = vmatprep.subr.mxu0 0.0
    %327 = vmatpush1.msra.mxu0 0.0
    %328 = vmatprep.subr.mxu0 0.0
    %329 = vmatpush1.msra.mxu0 0.0
    %330 = vmatprep.subr.mxu0 0.0
    %331 = vmatpush1.msra.mxu0 0.0
    %332 = vmatprep.subr.mxu0 0.0
    %333 = vmatpush1.msra.mxu0 0.0
    %334 = vmatprep.subr.mxu0 0.0
    %335 = vmatpush1.msra.mxu0 0.0
    %336 = vmatprep.subr.mxu0 0.0
    %337 = vmatpush1.msra.mxu0 0.0
    %338 = vmatprep.subr.mxu0 0.0
    %339 = vmatpush1.msra.mxu0 0.0
    %340 = vmatprep.subr.mxu0 0.0
    %341 = vmatpush1.msra.mxu0 0.0
    %342 = vmatprep.subr.mxu0 0.0
    %343 = vmatpush1.msra.mxu0 0.0
    %344 = vmatprep.subr.mxu0 0.0
    %345 = vmatpush1.msra.mxu0 0.0
    %346 = vmatprep.mubr.f32.mxu0 0.0
    %347 = vmatmul.mubr.f32.gmra.mrb[0].mxu0 %v265
    %v348 = vpop.f32.mrb[0].mxu0
    %v349 = vadd.f32 0.0, %v348
    %v350 = vpop.f32.mrb[0].mxu0
    %351 = vdwg.mxu0
    %352 = vst [vmem:[#allocation10] sm:$0xff] %v349
    // Predicated region
    $region42: #{tpu_custom_call.1} parent=1 // pred_check
      _
    $region43: #{tpu_custom_call.1} parent=1 // pred_check_branch
      %354 = sbr.rel (0) target = $region45
    $region44: #{tpu_custom_call.1} parent=1 // pred_region
      %s356 = ssub.s32 128, 128
      %357 = vsyncadd [#allocation4], %s356
      %s359 = sshll.u32 [#allocation10], 4
      %s360 = int_to_ptr.vmem [resolvable:$true] %s359
      %362 = dma.vmem_to_hbm [thread:$0]  %s360, 128, %s6, [#allocation4]
    $region45: #{tpu_custom_call.1} parent=1 // pred_fallthru
      _
    // Predicated region
    $region46: #{tpu_custom_call.1} parent=1 // pred_check
      _
    $region47: #{tpu_custom_call.1} parent=1 // pred_check_branch
      %364 = sbr.rel (0) target = $region49
    $region48: #{tpu_custom_call.1} parent=1 // pred_region
      %365 = dma.done [#allocation4], 128
    $region49: #{tpu_custom_call.1} parent=1 // pred_fallthru
      _
    %366 = vsyncpa [#allocation3], 1
    %367 = vsyncpa [#allocation6], 1
    %368 = vsyncpa [#allocation9], 1
    %369 = vsyncpa [#allocation4], 1

// kernel: tpu_custom_call.1
$region0: #{tpu_custom_call.1}
  #allocation0 [shape = 'u32[]', space=smem, size = 0x4, offset = 0x4, fixed_abs, tag = 'smem constant byte address 0x4 - core index']
  #allocation1 [shape = 'u32[144,128]{1,0:T(1,128)}', space=vmem, size = 0x12000, scoped, tag = 'internal scratch']
  %s0 = inlined_call_operand.hbm [shape: f32[8,128], index: 0, kind: input, shape index: {}]
  %s1 = inlined_call_operand.hbm [shape: f32[128,128], index: 1, kind: input, shape index: {}]
  %s2 = inlined_call_operand.vmem [shape: f32[1,128], index: 2, kind: input, shape index: {}]
  %s3 = inlined_call_operand.hbm [shape: f32[128,128], index: 3, kind: input, shape index: {}]
  %s4 = inlined_call_operand.vmem [shape: f32[1,128], index: 4, kind: input, shape index: {}]
  %s5 = inlined_call_operand.hbm [shape: f32[128,128], index: 5, kind: input, shape index: {}]
  %s6 = inlined_call_operand.hbm [shape: f32[8,128], index: 6, kind: output, shape index: {}]
  %s7 = sld [smem:[#allocation0]]
  $region50: #{tpu_custom_call.1} parent=0
    _
  %s9 = ssub.s32 1, %s7
  %s10 = scalar_select 0, %s9, %s7
  $region1: #{tpu_custom_call.1} parent=0
    #allocation2 [shape = 'u8[4096]{0}', space=vmem, size = 0x1000, scoped, tag = 'input window, operand 0, single buffered']
    #allocation3 [shape = 's32[1]{0}', space=sflag, size = 0x4, scoped, tag = 'scoped memory for tpu_custom_call.1']
    #allocation4 [shape = 's32[1]{0}', space=sflag, size = 0x4, scoped, tag = 'scoped memory for tpu_custom_call.1']
    #allocation5 [shape = 'u8[65536]{0}', space=vmem, size = 0x10000, scoped, tag = 'input window, operand 1, single buffered']
    #allocation6 [shape = 's32[1]{0}', space=sflag, size = 0x4, scoped, tag = 'scoped memory for tpu_custom_call.1']
    #allocation7 [shape = 'u8[65536]{0}', space=vmem, size = 0x10000, scoped, tag = 'input window, operand 3, single buffered']
    #allocation8 [shape = 'u8[65536]{0}', space=vmem, size = 0x10000, scoped, tag = 'input window, operand 5, single buffered']
    #allocation9 [shape = 's32[1]{0}', space=sflag, size = 0x4, scoped, tag = 'scoped memory for tpu_custom_call.1']
    #allocation10 [shape = 'u8[4096]{0}', space=vmem, size = 0x1000, scoped, tag = 'output window, operand 0, single buffered']
    %11 = vsyncpa [#allocation3], 0
    %12 = vsyncpa [#allocation6], 0
    %13 = vsyncpa [#allocation9], 0
    %14 = vsyncpa [#allocation4], 0
    // Predicated region
    $region2: #{tpu_custom_call.1} parent=1 // pred_check
      _
    $region3: #{tpu_custom_call.1} parent=1 // pred_check_branch
      %16 = sbr.rel (0) target = $region5
    $region4: #{tpu_custom_call.1} parent=1 // pred_region
      %s18 = ssub.s32 128, 128
      %19 = vsyncadd [#allocation3], %s18
      %s21 = sshll.u32 [#allocation2], 4
      %s22 = int_to_ptr.vmem [resolvable:$true] %s21
      %24 = dma.hbm_to_vmem [thread:$0]  %s0, 128, %s22, [#allocation3]
    $region5: #{tpu_custom_call.1} parent=1 // pred_fallthru
      _
    // Predicated region
    $region6: #{tpu_custom_call.1} parent=1 // pred_check
      _
    $region7: #{tpu_custom_call.1} parent=1 // pred_check_branch
      %26 = sbr.rel (0) target = $region9
    $region8: #{tpu_custom_call.1} parent=1 // pred_region
      %s28 = ssub.s32 2048, 2048
      %29 = vsyncadd [#allocation6], %s28
      %s30 = sshll.u32 [#allocation5], 4
      %s31 = int_to_ptr.vmem [resolvable:$true] %s30
      %36 = dma.hbm_to_vmem [thread:$0]  %s1, 2048, %s31, [#allocation6], 128, 128, 8
    $region9: #{tpu_custom_call.1} parent=1 // pred_fallthru
      _
    // Predicated region
    $region10: #{tpu_custom_call.1} parent=1 // pred_check
      _
    $region11: #{tpu_custom_call.1} parent=1 // pred_check_branch
      %38 = sbr.rel (0) target = $region13
    $region12: #{tpu_custom_call.1} parent=1 // pred_region
      _
    $region13: #{tpu_custom_call.1} parent=1 // pred_fallthru
      _
    // Predicated region
    $region14: #{tpu_custom_call.1} parent=1 // pred_check
      _
    $region15: #{tpu_custom_call.1} parent=1 // pred_check_branch
      %40 = sbr.rel (0) target = $region17
    $region16: #{tpu_custom_call.1} parent=1 // pred_region
      %s42 = ssub.s32 2048, 2048
      %43 = vsyncadd [#allocation6], %s42
      %s44 = sshll.u32 [#allocation7], 4
      %s45 = int_to_ptr.vmem [resolvable:$true] %s44
      %50 = dma.hbm_to_vmem [thread:$0]  %s3, 2048, %s45, [#allocation6], 128, 128, 8
    $region17: #{tpu_custom_call.1} parent=1 // pred_fallthru
      _
    // Predicated region
    $region18: #{tpu_custom_call.1} parent=1 // pred_check
      _
    $region19: #{tpu_custom_call.1} parent=1 // pred_check_branch
      %52 = sbr.rel (0) target = $region21
    $region20: #{tpu_custom_call.1} parent=1 // pred_region
      _
    $region21: #{tpu_custom_call.1} parent=1 // pred_fallthru
      _
    // Predicated region
    $region22: #{tpu_custom_call.1} parent=1 // pred_check
      _
    $region23: #{tpu_custom_call.1} parent=1 // pred_check_branch
      %54 = sbr.rel (0) target = $region25
    $region24: #{tpu_custom_call.1} parent=1 // pred_region
      %s56 = ssub.s32 2048, 2048
      %57 = vsyncadd [#allocation9], %s56
      %s58 = sshll.u32 [#allocation8], 4
      %s59 = int_to_ptr.vmem [resolvable:$true] %s58
      %64 = dma.hbm_to_vmem [thread:$0]  %s5, 2048, %s59, [#allocation9], 128, 128, 8
    $region25: #{tpu_custom_call.1} parent=1 // pred_fallthru
      _
    // Predicated region
    $region26: #{tpu_custom_call.1} parent=1 // pred_check
      _
    $region27: #{tpu_custom_call.1} parent=1 // pred_check_branch
      %66 = sbr.rel (0) target = $region29
    $region28: #{tpu_custom_call.1} parent=1 // pred_region
      %67 = dma.done [#allocation3], 128
    $region29: #{tpu_custom_call.1} parent=1 // pred_fallthru
      _
    // Predicated region
    $region30: #{tpu_custom_call.1} parent=1 // pred_check
      _
    $region31: #{tpu_custom_call.1} parent=1 // pred_check_branch
      %69 = sbr.rel (0) target = $region33
    $region32: #{tpu_custom_call.1} parent=1 // pred_region
      %70 = dma.done [#allocation6], 2048
    $region33: #{tpu_custom_call.1} parent=1 // pred_fallthru
      _
    // Predicated region
    $region34: #{tpu_custom_call.1} parent=1 // pred_check
      _
    $region35: #{tpu_custom_call.1} parent=1 // pred_check_branch
      %72 = sbr.rel (0) target = $region37
    $region36: #{tpu_custom_call.1} parent=1 // pred_region
      %73 = dma.done [#allocation6], 2048
    $region37: #{tpu_custom_call.1} parent=1 // pred_fallthru
      _
    // Predicated region
    $region38: #{tpu_custom_call.1} parent=1 // pred_check
      _
    $region39: #{tpu_custom_call.1} parent=1 // pred_check_branch
      %75 = sbr.rel (0) target = $region41
    $region40: #{tpu_custom_call.1} parent=1 // pred_region
      %76 = dma.done [#allocation9], 2048
    $region41: #{tpu_custom_call.1} parent=1 // pred_fallthru
      _
    %v77 = vld [vmem:[#allocation2] sm:$0xff]
    %v78 = vld [vmem:[#allocation5] sm:$0xff]
    %v79 = vld [vmem:[#allocation5 + $0x8] sm:$0xff]
    %v80 = vld [vmem:[#allocation5 + $0x10] sm:$0xff]
    %v81 = vld [vmem:[#allocation5 + $0x18] sm:$0xff]
    %v82 = vld [vmem:[#allocation5 + $0x20] sm:$0xff]
    %v83 = vld [vmem:[#allocation5 + $0x28] sm:$0xff]
    %v84 = vld [vmem:[#allocation5 + $0x30] sm:$0xff]
    %v85 = vld [vmem:[#allocation5 + $0x38] sm:$0xff]
    %v86 = vld [vmem:[#allocation5 + $0x40] sm:$0xff]
    %v87 = vld [vmem:[#allocation5 + $0x48] sm:$0xff]
    %v88 = vld [vmem:[#allocation5 + $0x50] sm:$0xff]
    %v89 = vld [vmem:[#allocation5 + $0x58] sm:$0xff]
    %v90 = vld [vmem:[#allocation5 + $0x60] sm:$0xff]
    %v91 = vld [vmem:[#allocation5 + $0x68] sm:$0xff]
    %v92 = vld [vmem:[#allocation5 + $0x70] sm:$0xff]
    %v93 = vld [vmem:[#allocation5 + $0x78] sm:$0xff]
    %v94 = vld [vmem:[%s2] sm:$0x1]
    %v96 = vlaneseq
    %v97 = vshrl.u32 %v96, 7
    %v98 = vsub.s32 0, %v97
    %v99 = vrot.slane %v94, %v98
    %101 = vmatprep.subr.mxu0 0.0
    %102 = vmatpush1.msra.mxu0 %v78
    %103 = vmatprep.subr.mxu0 0.0
    %104 = vmatpush1.msra.mxu0 %v79
    %105 = vmatprep.subr.mxu0 0.0
    %106 = vmatpush1.msra.mxu0 %v80
    %107 = vmatprep.subr.mxu0 0.0
    %108 = vmatpush1.msra.mxu0 %v81
    %109 = vmatprep.subr.mxu0 0.0
    %110 = vmatpush1.msra.mxu0 %v82
    %111 = vmatprep.subr.mxu0 0.0
    %112 = vmatpush1.msra.mxu0 %v83
    %113 = vmatprep.subr.mxu0 0.0
    %114 = vmatpush1.msra.mxu0 %v84
    %115 = vmatprep.subr.mxu0 0.0
    %116 = vmatpush1.msra.mxu0 %v85
    %117 = vmatprep.subr.mxu0 0.0
    %118 = vmatpush1.msra.mxu0 %v86
    %119 = vmatprep.subr.mxu0 0.0
    %120 = vmatpush1.msra.mxu0 %v87
    %121 = vmatprep.subr.mxu0 0.0
    %122 = vmatpush1.msra.mxu0 %v88
    %123 = vmatprep.subr.mxu0 0.0
    %124 = vmatpush1.msra.mxu0 %v89
    %125 = vmatprep.subr.mxu0 0.0
    %126 = vmatpush1.msra.mxu0 %v90
    %127 = vmatprep.subr.mxu0 0.0
    %128 = vmatpush1.msra.mxu0 %v91
    %129 = vmatprep.subr.mxu0 0.0
    %130 = vmatpush1.msra.mxu0 %v92
    %131 = vmatprep.subr.mxu0 0.0
    %132 = vmatpush1.msra.mxu0 %v93
    %133 = vmatprep.subr.mxu0 0.0
    %134 = vmatpush1.msra.mxu0 0.0
    %135 = vmatprep.subr.mxu0 0.0
    %136 = vmatpush1.msra.mxu0 0.0
    %137 = vmatprep.subr.mxu0 0.0
    %138 = vmatpush1.msra.mxu0 0.0
    %139 = vmatprep.subr.mxu0 0.0
    %140 = vmatpush1.msra.mxu0 0.0
    %141 = vmatprep.subr.mxu0 0.0
    %142 = vmatpush1.msra.mxu0 0.0
    %143 = vmatprep.subr.mxu0 0.0
    %144 = vmatpush1.msra.mxu0 0.0
    %145 = vmatprep.subr.mxu0 0.0
    %146 = vmatpush1.msra.mxu0 0.0
    %147 = vmatprep.subr.mxu0 0.0
    %148 = vmatpush1.msra.mxu0 0.0
    %149 = vmatprep.subr.mxu0 0.0
    %150 = vmatpush1.msra.mxu0 0.0
    %151 = vmatprep.subr.mxu0 0.0
    %152 = vmatpush1.msra.mxu0 0.0
    %153 = vmatprep.subr.mxu0 0.0
    %154 = vmatpush1.msra.mxu0 0.0
    %155 = vmatprep.subr.mxu0 0.0
    %156 = vmatpush1.msra.mxu0 0.0
    %157 = vmatprep.subr.mxu0 0.0
    %158 = vmatpush1.msra.mxu0 0.0
    %159 = vmatprep.subr.mxu0 0.0
    %160 = vmatpush1.msra.mxu0 0.0
    %161 = vmatprep.subr.mxu0 0.0
    %162 = vmatpush1.msra.mxu0 0.0
    %163 = vmatprep.subr.mxu0 0.0
    %164 = vmatpush1.msra.mxu0 0.0
    %165 = vmatprep.mubr.f32.mxu0 0.0
    %166 = vmatmul.mubr.f32.gmra.mrb[0].mxu0 %v77
    %v167 = vpop.f32.mrb[0].mxu0
    %v168 = vadd.f32 %v99, %v167
    %v169 = vpop.f32.mrb[0].mxu0
    %170 = vdwg.mxu0
    %v171 = vmax.f32 %v168, 0.0
    %v172 = vld [vmem:[#allocation7] sm:$0xff]
    %v173 = vld [vmem:[#allocation7 + $0x8] sm:$0xff]
    %v174 = vld [vmem:[#allocation7 + $0x10] sm:$0xff]
    %v175 = vld [vmem:[#allocation7 + $0x18] sm:$0xff]
    %v176 = vld [vmem:[#allocation7 + $0x20] sm:$0xff]
    %v177 = vld [vmem:[#allocation7 + $0x28] sm:$0xff]
    %v178 = vld [vmem:[#allocation7 + $0x30] sm:$0xff]
    %v179 = vld [vmem:[#allocation7 + $0x38] sm:$0xff]
    %v180 = vld [vmem:[#allocation7 + $0x40] sm:$0xff]
    %v181 = vld [vmem:[#allocation7 + $0x48] sm:$0xff]
    %v182 = vld [vmem:[#allocation7 + $0x50] sm:$0xff]
    %v183 = vld [vmem:[#allocation7 + $0x58] sm:$0xff]
    %v184 = vld [vmem:[#allocation7 + $0x60] sm:$0xff]
    %v185 = vld [vmem:[#allocation7 + $0x68] sm:$0xff]
    %v186 = vld [vmem:[#allocation7 + $0x70] sm:$0xff]
    %v187 = vld [vmem:[#allocation7 + $0x78] sm:$0xff]
    %v188 = vld [vmem:[%s4] sm:$0x1]
    %v190 = vlaneseq
    %v191 = vshrl.u32 %v190, 7
    %v192 = vsub.s32 0, %v191
    %v193 = vrot.slane %v188, %v192
    %195 = vmatprep.subr.mxu0 0.0
    %196 = vmatpush1.msra.mxu0 %v172
    %197 = vmatprep.subr.mxu0 0.0
    %198 = vmatpush1.msra.mxu0 %v173
    %199 = vmatprep.subr.mxu0 0.0
    %200 = vmatpush1.msra.mxu0 %v174
    %201 = vmatprep.subr.mxu0 0.0
    %202 = vmatpush1.msra.mxu0 %v175
    %203 = vmatprep.subr.mxu0 0.0
    %204 = vmatpush1.msra.mxu0 %v176
    %205 = vmatprep.subr.mxu0 0.0
    %206 = vmatpush1.msra.mxu0 %v177
    %207 = vmatprep.subr.mxu0 0.0
    %208 = vmatpush1.msra.mxu0 %v178
    %209 = vmatprep.subr.mxu0 0.0
    %210 = vmatpush1.msra.mxu0 %v179
    %211 = vmatprep.subr.mxu0 0.0
    %212 = vmatpush1.msra.mxu0 %v180
    %213 = vmatprep.subr.mxu0 0.0
    %214 = vmatpush1.msra.mxu0 %v181
    %215 = vmatprep.subr.mxu0 0.0
    %216 = vmatpush1.msra.mxu0 %v182
    %217 = vmatprep.subr.mxu0 0.0
    %218 = vmatpush1.msra.mxu0 %v183
    %219 = vmatprep.subr.mxu0 0.0
    %220 = vmatpush1.msra.mxu0 %v184
    %221 = vmatprep.subr.mxu0 0.0
    %222 = vmatpush1.msra.mxu0 %v185
    %223 = vmatprep.subr.mxu0 0.0
    %224 = vmatpush1.msra.mxu0 %v186
    %225 = vmatprep.subr.mxu0 0.0
    %226 = vmatpush1.msra.mxu0 %v187
    %227 = vmatprep.subr.mxu0 0.0
    %228 = vmatpush1.msra.mxu0 0.0
    %229 = vmatprep.subr.mxu0 0.0
    %230 = vmatpush1.msra.mxu0 0.0
    %231 = vmatprep.subr.mxu0 0.0
    %232 = vmatpush1.msra.mxu0 0.0
    %233 = vmatprep.subr.mxu0 0.0
    %234 = vmatpush1.msra.mxu0 0.0
    %235 = vmatprep.subr.mxu0 0.0
    %236 = vmatpush1.msra.mxu0 0.0
    %237 = vmatprep.subr.mxu0 0.0
    %238 = vmatpush1.msra.mxu0 0.0
    %239 = vmatprep.subr.mxu0 0.0
    %240 = vmatpush1.msra.mxu0 0.0
    %241 = vmatprep.subr.mxu0 0.0
    %242 = vmatpush1.msra.mxu0 0.0
    %243 = vmatprep.subr.mxu0 0.0
    %244 = vmatpush1.msra.mxu0 0.0
    %245 = vmatprep.subr.mxu0 0.0
    %246 = vmatpush1.msra.mxu0 0.0
    %247 = vmatprep.subr.mxu0 0.0
    %248 = vmatpush1.msra.mxu0 0.0
    %249 = vmatprep.subr.mxu0 0.0
    %250 = vmatpush1.msra.mxu0 0.0
    %251 = vmatprep.subr.mxu0 0.0
    %252 = vmatpush1.msra.mxu0 0.0
    %253 = vmatprep.subr.mxu0 0.0
    %254 = vmatpush1.msra.mxu0 0.0
    %255 = vmatprep.subr.mxu0 0.0
    %256 = vmatpush1.msra.mxu0 0.0
    %257 = vmatprep.subr.mxu0 0.0
    %258 = vmatpush1.msra.mxu0 0.0
    %259 = vmatprep.mubr.f32.mxu0 0.0
    %260 = vmatmul.mubr.f32.gmra.mrb[0].mxu0 %v171
    %v261 = vpop.f32.mrb[0].mxu0
    %v262 = vadd.f32 %v193, %v261
    %v263 = vpop.f32.mrb[0].mxu0
    %264 = vdwg.mxu0
    %v265 = vmax.f32 %v262, 0.0
    %v266 = vld [vmem:[#allocation8] sm:$0xff]
    %v267 = vld [vmem:[#allocation8 + $0x8] sm:$0xff]
    %v268 = vld [vmem:[#allocation8 + $0x10] sm:$0xff]
    %v269 = vld [vmem:[#allocation8 + $0x18] sm:$0xff]
    %v270 = vld [vmem:[#allocation8 + $0x20] sm:$0xff]
    %v271 = vld [vmem:[#allocation8 + $0x28] sm:$0xff]
    %v272 = vld [vmem:[#allocation8 + $0x30] sm:$0xff]
    %v273 = vld [vmem:[#allocation8 + $0x38] sm:$0xff]
    %v274 = vld [vmem:[#allocation8 + $0x40] sm:$0xff]
    %v275 = vld [vmem:[#allocation8 + $0x48] sm:$0xff]
    %v276 = vld [vmem:[#allocation8 + $0x50] sm:$0xff]
    %v277 = vld [vmem:[#allocation8 + $0x58] sm:$0xff]
    %v278 = vld [vmem:[#allocation8 + $0x60] sm:$0xff]
    %v279 = vld [vmem:[#allocation8 + $0x68] sm:$0xff]
    %v280 = vld [vmem:[#allocation8 + $0x70] sm:$0xff]
    %v281 = vld [vmem:[#allocation8 + $0x78] sm:$0xff]
    %282 = vmatprep.subr.mxu0 0.0
    %283 = vmatpush1.msra.mxu0 %v266
    %284 = vmatprep.subr.mxu0 0.0
    %285 = vmatpush1.msra.mxu0 %v267
    %286 = vmatprep.subr.mxu0 0.0
    %287 = vmatpush1.msra.mxu0 %v268
    %288 = vmatprep.subr.mxu0 0.0
    %289 = vmatpush1.msra.mxu0 %v269
    %290 = vmatprep.subr.mxu0 0.0
    %291 = vmatpush1.msra.mxu0 %v270
    %292 = vmatprep.subr.mxu0 0.0
    %293 = vmatpush1.msra.mxu0 %v271
    %294 = vmatprep.subr.mxu0 0.0
    %295 = vmatpush1.msra.mxu0 %v272
    %296 = vmatprep.subr.mxu0 0.0
    %297 = vmatpush1.msra.mxu0 %v273
    %298 = vmatprep.subr.mxu0 0.0
    %299 = vmatpush1.msra.mxu0 %v274
    %300 = vmatprep.subr.mxu0 0.0
    %301 = vmatpush1.msra.mxu0 %v275
    %302 = vmatprep.subr.mxu0 0.0
    %303 = vmatpush1.msra.mxu0 %v276
    %304 = vmatprep.subr.mxu0 0.0
    %305 = vmatpush1.msra.mxu0 %v277
    %306 = vmatprep.subr.mxu0 0.0
    %307 = vmatpush1.msra.mxu0 %v278
    %308 = vmatprep.subr.mxu0 0.0
    %309 = vmatpush1.msra.mxu0 %v279
    %310 = vmatprep.subr.mxu0 0.0
    %311 = vmatpush1.msra.mxu0 %v280
    %312 = vmatprep.subr.mxu0 0.0
    %313 = vmatpush1.msra.mxu0 %v281
    %314 = vmatprep.subr.mxu0 0.0
    %315 = vmatpush1.msra.mxu0 0.0
    %316 = vmatprep.subr.mxu0 0.0
    %317 = vmatpush1.msra.mxu0 0.0
    %318 = vmatprep.subr.mxu0 0.0
    %319 = vmatpush1.msra.mxu0 0.0
    %320 = vmatprep.subr.mxu0 0.0
    %321 = vmatpush1.msra.mxu0 0.0
    %322 = vmatprep.subr.mxu0 0.0
    %323 = vmatpush1.msra.mxu0 0.0
    %324 = vmatprep.subr.mxu0 0.0
    %325 = vmatpush1.msra.mxu0 0.0
    %326 = vmatprep.subr.mxu0 0.0
    %327 = vmatpush1.msra.mxu0 0.0
    %328 = vmatprep.subr.mxu0 0.0
    %329 = vmatpush1.msra.mxu0 0.0
    %330 = vmatprep.subr.mxu0 0.0
    %331 = vmatpush1.msra.mxu0 0.0
    %332 = vmatprep.subr.mxu0 0.0
    %333 = vmatpush1.msra.mxu0 0.0
    %334 = vmatprep.subr.mxu0 0.0
    %335 = vmatpush1.msra.mxu0 0.0
    %336 = vmatprep.subr.mxu0 0.0
    %337 = vmatpush1.msra.mxu0 0.0
    %338 = vmatprep.subr.mxu0 0.0
    %339 = vmatpush1.msra.mxu0 0.0
    %340 = vmatprep.subr.mxu0 0.0
    %341 = vmatpush1.msra.mxu0 0.0
    %342 = vmatprep.subr.mxu0 0.0
    %343 = vmatpush1.msra.mxu0 0.0
    %344 = vmatprep.subr.mxu0 0.0
    %345 = vmatpush1.msra.mxu0 0.0
    %346 = vmatprep.mubr.f32.mxu0 0.0
    %347 = vmatmul.mubr.f32.gmra.mrb[0].mxu0 %v265
    %v348 = vpop.f32.mrb[0].mxu0
    %v349 = vadd.f32 0.0, %v348
    %v350 = vpop.f32.mrb[0].mxu0
    %351 = vdwg.mxu0
    %352 = vst [vmem:[#allocation10] sm:$0xff] %v349
    // Predicated region
    $region42: #{tpu_custom_call.1} parent=1 // pred_check
      _
    $region43: #{tpu_custom_call.1} parent=1 // pred_check_branch
      %354 = sbr.rel (0) target = $region45
    $region44: #{tpu_custom_call.1} parent=1 // pred_region
      %s356 = ssub.s32 128, 128
      %357 = vsyncadd [#allocation4], %s356
      %s359 = sshll.u32 [#allocation10], 4
      %s360 = int_to_ptr.vmem [resolvable:$true] %s359
      %362 = dma.vmem_to_hbm [thread:$0]  %s360, 128, %s6, [#allocation4]
    $region45: #{tpu_custom_call.1} parent=1 // pred_fallthru
      _
    // Predicated region
    $region46: #{tpu_custom_call.1} parent=1 // pred_check
      _
    $region47: #{tpu_custom_call.1} parent=1 // pred_check_branch
      %364 = sbr.rel (0) target = $region49
    $region48: #{tpu_custom_call.1} parent=1 // pred_region
      %365 = dma.done [#allocation4], 128
    $region49: #{tpu_custom_call.1} parent=1 // pred_fallthru
      _
    %366 = vsyncpa [#allocation3], 1
    %367 = vsyncpa [#allocation6], 1
    %368 = vsyncpa [#allocation9], 1
    %369 = vsyncpa [#allocation4], 1

</llo_original>
